<compile_context>
chip_gen: v7x
topology: tpu7x:2x2x1
jax: 0.10.0
libtpu: 0.0.40
codegen_flags: <defaults>
</compile_context>

<pallas_src>
import jax
import jax.numpy as jnp
from jax.experimental import pallas as pl
from jax.experimental.pallas import tpu as pltpu

_LANE = 128
_SUBLANE = 8
_MAX_TILE_BYTES = 8 * 1024 * 1024   # per-block cap: 4 buffers (2in+2out) <= 32 MiB


def _identity_kernel(x_ref, o_ref):
    # Pure pass-through: EncoderWrapper.forward performs no computation.
    # The write is required even with input/output aliasing so the aliased
    # output is not treated as dead.
    o_ref[...] = x_ref[...]


def _pick_lanes(total: int) -> int:
    """Largest lane width (multiple of 128) that divides `total`, keeping the
    sublane (row) count >= 8 when possible."""
    lanes = _LANE
    while (total % (lanes * 2) == 0
           and (total // (lanes * 2)) >= _SUBLANE
           and lanes < 2048):
        lanes *= 2
    return lanes


def _pick_tile_rows(rows: int, lanes: int, itemsize: int) -> int:
    """Row-tile size: multiple of 8, divides `rows` evenly (no ragged tail /
    masked stores), and keeps the per-tile footprint under _MAX_TILE_BYTES."""
    if rows % _SUBLANE != 0:
        # Full-extent block satisfies the (8,128) rule by equality.
        return rows
    max_rows_by_bytes = max(_SUBLANE, _MAX_TILE_BYTES // (lanes * itemsize))
    tile = min(rows, 2048, max_rows_by_bytes)
    tile = max(_SUBLANE, (tile // _SUBLANE) * _SUBLANE)
    while rows % tile != 0:     # shrink to an even divisor (terminates at 8)
        tile -= _SUBLANE
    return tile


def encoder_wrapper_forward(x: jax.Array) -> jax.Array:
    """Pallas equivalent of EncoderWrapper.forward (a no-op wrapper).

    Args:
      x: input tensor in NCHW layout, shape [N, C, H, W].
    Returns:
      The input, passed through an aliased Pallas identity kernel
      (same shape/dtype). For shapes that cannot be made lane-dense the
      kernel is elided and `x` is returned directly.
    """
    orig_shape = x.shape
    total = x.size

    # No-op module: if we cannot present a lane-dense (multiple-of-128) slab,
    # the cheapest faithful implementation is to not launch a kernel at all.
    if total == 0 or total % _LANE != 0:
        return x

    lanes = _pick_lanes(total)
    rows = total // lanes
    x2d = x.reshape(rows, lanes)

    tile_rows = _pick_tile_rows(rows, lanes, x2d.dtype.itemsize)
    grid = (rows // tile_rows,)
    tile_bytes = tile_rows * lanes * x2d.dtype.itemsize
    # 2 inputs-bufs + 2 output-bufs (double buffering) + margin; stays < 48 MiB
    # given the 8 MiB per-tile cap, which fits every generation (v7x: 64 MiB).
    vmem_limit = min(48 * 1024 * 1024,
                     max(32 * 1024 * 1024, 4 * tile_bytes + (4 << 20)))

    out2d = pl.pallas_call(
        _identity_kernel,
        out_shape=jax.ShapeDtypeStruct((rows, lanes), x2d.dtype),
        grid=grid,
        in_specs=[pl.BlockSpec((tile_rows, lanes), lambda i: (i, 0))],
        out_specs=pl.BlockSpec((tile_rows, lanes), lambda i: (i, 0)),
        input_output_aliases={0: 0},
        compiler_params=pltpu.CompilerParams(
            dimension_semantics=("parallel",),
            vmem_limit_bytes=vmem_limit,
        ),
    )(x2d)

    return out2d.reshape(orig_shape)


if __name__ == "__main__":
    key = jax.random.PRNGKey(0)
    # Small, NCHW-consistent example input: batch=2, channels=4, spatial=16.
    x = jax.random.normal(key, (2, 4, 16, 16), dtype=jnp.float32)

    y = encoder_wrapper_forward(x)
    jax.block_until_ready(y)

    # Sanity check: the wrapper is a no-op, so output must equal input exactly.
    assert y.shape == x.shape and y.dtype == x.dtype
    assert bool(jnp.all(y == x))

    print("KERNEL_OK")
</pallas_src>

<mosaic_0001>
module attributes {stable_mosaic.version = 11 : i64} {
  func.func @_identity_kernel(%arg0: i32, %arg1: memref<8x256xf32, #tpu.memory_space<vmem>>, %arg2: memref<8x256xf32, #tpu.memory_space<vmem>>) attributes {dimension_semantics = [#tpu.dimension_semantics<parallel>], iteration_bounds = array<i64: 1>, scalar_prefetch = 0 : i64, scratch_operands = 0 : i64, tpu.core_type = #tpu.core_type<tc>, window_params = [{transform_indices = @transform_0, window_bounds = array<i64: 8, 256>}, {transform_indices = @transform_1, window_bounds = array<i64: 8, 256>}]} {
    %c0 = arith.constant 0 : index
    %c0_0 = arith.constant 0 : index
    %0 = vector.load %arg1[%c0, %c0_0] : memref<8x256xf32, #tpu.memory_space<vmem>>, vector<8x256xf32>
    %c0_1 = arith.constant 0 : index
    %c0_2 = arith.constant 0 : index
    %1 = vector.load %arg2[%c0_1, %c0_2] : memref<8x256xf32, #tpu.memory_space<vmem>>, vector<8x256xf32>
    tpu.vector_store %arg2[%c0_1, %c0_2], %0 {strides = array<i32>} : memref<8x256xf32, #tpu.memory_space<vmem>>, vector<8x256xf32>,
    return
  }
  func.func @transform_0(%arg0: i32) -> (i32, i32) {
    %c0_i32 = arith.constant 0 : i32
    %c0_i32_0 = arith.constant 0 : i32
    return %arg0, %c0_i32 : i32, i32
  }
  func.func @transform_1(%arg0: i32) -> (i32, i32) {
    %c0_i32 = arith.constant 0 : i32
    %c0_i32_0 = arith.constant 0 : i32
    return %arg0, %c0_i32 : i32, i32
  }
}

</mosaic_0001>

<llo_original>
// kernel: tpu_custom_call.1
$region0: #{tpu_custom_call.1}
  #allocation0 [shape = 'u32[]', space=smem, size = 0x4, offset = 0x4, fixed_abs, tag = 'smem constant byte address 0x4 - core index']
  #allocation1 [shape = 'u32[144,128]{1,0:T(1,128)}', space=vmem, size = 0x12000, scoped, tag = 'internal scratch']
  %s0 = inlined_call_operand.hbm [shape: f32[8,256], index: 0, kind: input, shape index: {}, may-alias: {0,1}]
  %s1 = inlined_call_operand.hbm [shape: f32[8,256], index: 1, kind: output, shape index: {}, may-alias: {0,1}]
  %s2 = sld [smem:[#allocation0]]
  $region18: #{tpu_custom_call.1} parent=0
    _
  %s4 = ssub.s32 1, %s2
  %s5 = scalar_select 0, %s4, %s2
  $region1: #{tpu_custom_call.1} parent=0
    #allocation2 [shape = 'u8[8192]{0}', space=vmem, size = 0x2000, scoped, tag = 'input window, operand 0, single buffered']
    #allocation3 [shape = 's32[1]{0}', space=sflag, size = 0x4, scoped, tag = 'scoped memory for tpu_custom_call.1']
    #allocation4 [shape = 's32[1]{0}', space=sflag, size = 0x4, scoped, tag = 'scoped memory for tpu_custom_call.1']
    #allocation5 [shape = 'u8[8192]{0}', space=vmem, size = 0x2000, scoped, tag = 'output window, operand 0, single buffered']
    %6 = vsyncpa [#allocation3], 0
    %7 = vsyncpa [#allocation4], 0
    // Predicated region
    $region2: #{tpu_custom_call.1} parent=1 // pred_check
      _
    $region3: #{tpu_custom_call.1} parent=1 // pred_check_branch
      %9 = sbr.rel (0) target = $region5
    $region4: #{tpu_custom_call.1} parent=1 // pred_region
      %s11 = ssub.s32 256, 256
      %12 = vsyncadd [#allocation3], %s11
      %s14 = sshll.u32 [#allocation2], 4
      %s15 = int_to_ptr.vmem [resolvable:$true] %s14
      %17 = dma.hbm_to_vmem [thread:$0]  %s0, 256, %s15, [#allocation3]
    $region5: #{tpu_custom_call.1} parent=1 // pred_fallthru
      _
    // Predicated region
    $region6: #{tpu_custom_call.1} parent=1 // pred_check
      _
    $region7: #{tpu_custom_call.1} parent=1 // pred_check_branch
      %19 = sbr.rel (0) target = $region9
    $region8: #{tpu_custom_call.1} parent=1 // pred_region
      %20 = dma.done [#allocation3], 256
    $region9: #{tpu_custom_call.1} parent=1 // pred_fallthru
      _
    %v21 = vld [vmem:[#allocation2] sm:$0xff]
    %v22 = vld [vmem:[#allocation2 + $0x8] sm:$0xff]
    %23 = vst [vmem:[#allocation5] sm:$0xff] %v21
    %24 = vst [vmem:[#allocation5 + $0x8] sm:$0xff] %v22
    // Predicated region
    $region10: #{tpu_custom_call.1} parent=1 // pred_check
      _
    $region11: #{tpu_custom_call.1} parent=1 // pred_check_branch
      %26 = sbr.rel (0) target = $region13
    $region12: #{tpu_custom_call.1} parent=1 // pred_region
      %s28 = ssub.s32 256, 256
      %29 = vsyncadd [#allocation4], %s28
      %s31 = sshll.u32 [#allocation5], 4
      %s32 = int_to_ptr.vmem [resolvable:$true] %s31
      %34 = dma.vmem_to_hbm [thread:$0]  %s32, 256, %s1, [#allocation4]
    $region13: #{tpu_custom_call.1} parent=1 // pred_fallthru
      _
    // Predicated region
    $region14: #{tpu_custom_call.1} parent=1 // pred_check
      _
    $region15: #{tpu_custom_call.1} parent=1 // pred_check_branch
      %36 = sbr.rel (0) target = $region17
    $region16: #{tpu_custom_call.1} parent=1 // pred_region
      %37 = dma.done [#allocation4], 256
    $region17: #{tpu_custom_call.1} parent=1 // pred_fallthru
      _
    %38 = vsyncpa [#allocation3], 1
    %39 = vsyncpa [#allocation4], 1

</llo_original>
